<compile_context>
chip_gen: v7x
topology: tpu7x:2x2x1
jax: 0.10.0
libtpu: 0.0.40
codegen_flags: <defaults>
</compile_context>

<pallas_src>
import jax
import jax.numpy as jnp
from jax.experimental import pallas as pl
from jax.experimental.pallas import tpu as pltpu

_LOG2PI = 1.8378770664093453  # log(2*pi)


def _elbo_kernel(x_ref, eps_ref, wenc_ref, benc_ref, wdec_ref, bdec_ref, loss_ref):
    """loss = -(1/(NI*B)) * sum_{i,b}[ log p(z_ib) + log p(x_b|z_ib) - log q(z_ib|x_b) ].

    log(2*pi) terms are folded analytically; the encoder matmul (eps-independent)
    is computed exactly once; all NI iterations run through one decoder matmul
    with M = NI*B.
    """
    x = x_ref[...]                                    # [B, D]  f32
    n_iter, batch, latent = eps_ref.shape
    feat = x.shape[1]

    # --- encoder (iteration-invariant): one fused matmul gives [mu | logvar] --
    enc = jnp.dot(x.astype(jnp.bfloat16), wenc_ref[...],
                  preferred_element_type=jnp.float32) + benc_ref[...]   # [B, 2L]
    # Lane slice at lane 16 inside a 32-lane value: acknowledged (review #5);
    # cheaper than masked math on the packed tensor at this width.
    mu = enc[:, :latent]                              # [B, L]
    logvar = enc[:, latent:]                          # [B, L]
    std = jnp.exp(0.5 * logvar)                       # EUP
    sum_logvar = jnp.sum(logvar)                      # scalar, iteration-invariant

    # --- reparameterized samples for ALL iterations, vectorized (review #1) ---
    eps = eps_ref[...]                                # [NI, B, L]  f32
    z3 = mu[None] + std[None] * eps                   # [NI, B, L]
    z_all = z3.reshape(n_iter * batch, latent)        # sublane collapse: layout no-op

    # --- decoder: one matmul over all iterations' samples (M = NI*B) ----------
    x_mean = jnp.dot(z_all.astype(jnp.bfloat16), wdec_ref[...],
                     preferred_element_type=jnp.float32) + bdec_ref[...]  # [NI*B, D]
    # No replicated x copies (review #2): reshape output back and broadcast x.
    diff3 = x[None] - x_mean.reshape(n_iter, batch, feat)                 # [NI, B, D]

    # --- loss, constants folded analytically ----------------------------------
    #   -(elbo_{i,b}) = 0.5 * [ sum_l z^2 + sum_d diff^2 - sum_l eps^2
    #                           - sum_l logvar + D*log(2*pi) ]
    sum_eps_sq = jnp.sum(eps * eps)                   # one reduce over [NI,B,L] (review #3)
    acc = jnp.sum(z3 * z3) + jnp.sum(diff3 * diff3) - sum_eps_sq
    loss = 0.5 * (acc / (n_iter * batch) - sum_logvar / batch + feat * _LOG2PI)
    loss_ref[0, 0] = loss


def elbo_forward(x, eps_all, params):
    """All `num_iterations` ELBO terms in one pallas_call (eps stacked [NI,B,L])."""
    w_enc, b_enc, w_dec, b_dec = params
    n_iter, batch, latent = eps_all.shape
    feat = x.shape[1]
    flops = (2 * batch * feat * (2 * latent)            # fused encoder matmul
             + 2 * n_iter * batch * latent * feat       # stacked decoder matmul
             + 8 * n_iter * batch * (latent + feat))    # elementwise + reductions
    bytes_accessed = (x.size * x.dtype.itemsize
                      + eps_all.size * eps_all.dtype.itemsize
                      + w_enc.size * w_enc.dtype.itemsize
                      + b_enc.size * b_enc.dtype.itemsize
                      + w_dec.size * w_dec.dtype.itemsize
                      + b_dec.size * b_dec.dtype.itemsize + 4)
    # TODO(synk): if batch/NI ever scale up, add a leading "parallel" grid axis
    # over batch with per-core partial sums (v7x megacore) and size tiles
    # against v7x's 32 MiB scoped-default VMEM; unnecessary at 64x32.
    return pl.pallas_call(
        _elbo_kernel,
        out_shape=jax.ShapeDtypeStruct((1, 1), jnp.float32),
        in_specs=[pl.BlockSpec(memory_space=pltpu.MemorySpace.VMEM)] * 6,
        out_specs=pl.BlockSpec(memory_space=pltpu.MemorySpace.SMEM),
        cost_estimate=pl.CostEstimate(flops=flops,
                                      transcendentals=batch * latent,
                                      bytes_accessed=bytes_accessed),
    )(x, eps_all, w_enc, b_enc, w_dec, b_dec)[0, 0]


@jax.jit
def elbo_loss(p_samples, eps_all, params):
    """Mirrors ELBO.forward: per-iteration -(q_lp - var_lp).mean(), averaged
    over num_iterations — folded into a single kernel launch."""
    return elbo_forward(p_samples, eps_all, params)
    # TODO(synk): optimizer (Adam) state / zero_grad / step are training-loop
    # machinery, not part of the forward pass, so they are not implemented here.


def make_params(key, feat_dim, latent_dim):
    """Deterministic 'variational_model' + 'q_model' parameters (no checkpoint)."""
    k1, k2, k3 = jax.random.split(key, 3)
    scale = 0.1
    w_mu = scale * jax.random.normal(k1, (feat_dim, latent_dim), jnp.float32)
    w_lv = scale * jax.random.normal(k2, (feat_dim, latent_dim), jnp.float32)
    # Fused encoder weight: one [D, 2L] matmul yields [mu | logvar].
    w_enc = jnp.concatenate([w_mu, w_lv], axis=1).astype(jnp.bfloat16)
    b_enc = jnp.zeros((1, 2 * latent_dim), jnp.float32)
    w_dec = (scale * jax.random.normal(k3, (latent_dim, feat_dim), jnp.float32)
             ).astype(jnp.bfloat16)
    b_dec = jnp.zeros((1, feat_dim), jnp.float32)
    return (w_enc, b_enc, w_dec, b_dec)


def elbo_loss_ref(x, eps_all, params):
    """Pure-JAX reference with the literal per-iteration loop of ELBO.forward."""
    w_enc, b_enc, w_dec, b_dec = params
    latent = w_dec.shape[0]
    enc = (jnp.dot(x.astype(jnp.bfloat16), w_enc,
                   preferred_element_type=jnp.float32) + b_enc)
    mu, logvar = enc[:, :latent], enc[:, latent:]
    std = jnp.exp(0.5 * logvar)
    total = 0.0
    for i in range(eps_all.shape[0]):
        eps = eps_all[i]
        z = mu + std * eps
        var_lp = -0.5 * jnp.sum(eps * eps + logvar + _LOG2PI, axis=-1)
        prior_lp = -0.5 * jnp.sum(z * z + _LOG2PI, axis=-1)
        x_mean = (jnp.dot(z.astype(jnp.bfloat16), w_dec,
                          preferred_element_type=jnp.float32) + b_dec)
        lik_lp = -0.5 * jnp.sum((x - x_mean) ** 2 + _LOG2PI, axis=-1)
        total = total + (-(prior_lp + lik_lp - var_lp)).mean()
    return total / eps_all.shape[0]


if __name__ == "__main__":
    key = jax.random.PRNGKey(0)
    k_params, k_data, k_noise = jax.random.split(key, 3)

    batch_size = 64      # ELBO.forward default batch_size
    feat_dim = 32
    latent_dim = 16
    num_iterations = 4   # exercises the folded multi-iteration path (module default is 1)

    params = make_params(k_params, feat_dim, latent_dim)

    # p_model.sample(batch_size): synthetic Gaussian samples (glue, not kernel).
    p_samples = jax.random.normal(k_data, (batch_size, feat_dim), jnp.float32)
    # Reparameterization noise for ALL iterations, drawn once: [NI, B, L].
    eps_all = jax.random.normal(
        k_noise, (num_iterations, batch_size, latent_dim), jnp.float32)

    loss = elbo_loss(p_samples, eps_all, params)
    jax.block_until_ready(loss)

    ref = elbo_loss_ref(p_samples, eps_all, params)
    assert loss.shape == () and bool(jnp.isfinite(loss))
    assert jnp.allclose(loss, ref, rtol=5e-3, atol=5e-3), (loss, ref)
    print("KERNEL_OK")
</pallas_src>

<mosaic_0001>
module attributes {stable_mosaic.version = 11 : i64} {
  func.func @_elbo_kernel(%arg0: memref<64x32xf32, #tpu.memory_space<vmem>>, %arg1: memref<4x64x16xf32, #tpu.memory_space<vmem>>, %arg2: memref<32x32xbf16, #tpu.memory_space<vmem>>, %arg3: memref<1x32xf32, #tpu.memory_space<vmem>>, %arg4: memref<16x32xbf16, #tpu.memory_space<vmem>>, %arg5: memref<1x32xf32, #tpu.memory_space<vmem>>, %arg6: memref<1x1xf32, #tpu.memory_space<smem>>) attributes {dimension_semantics = [], scalar_prefetch = 0 : i64, scratch_operands = 0 : i64, tpu.core_type = #tpu.core_type<tc>} {
    %c0 = arith.constant 0 : index
    %c0_0 = arith.constant 0 : index
    %0 = vector.load %arg0[%c0, %c0_0] : memref<64x32xf32, #tpu.memory_space<vmem>>, vector<64x32xf32>
    %1 = arith.truncf %0 : vector<64x32xf32> to vector<64x32xbf16>
    %c0_1 = arith.constant 0 : index
    %c0_2 = arith.constant 0 : index
    %2 = vector.load %arg2[%c0_1, %c0_2] : memref<32x32xbf16, #tpu.memory_space<vmem>>, vector<32x32xbf16>
    %cst = arith.constant dense<0.000000e+00> : vector<64x32xf32>
    %3 = tpu.matmul %1, %2, %cst {dimension_numbers = #tpu.dot_dimension_numbers<[1], [0], [0], [1], [0, 0, 1, 1], [], []>} : vector<64x32xbf16>, vector<32x32xbf16>, vector<64x32xf32> -> vector<64x32xf32>
    %c0_3 = arith.constant 0 : index
    %c0_4 = arith.constant 0 : index
    %4 = vector.load %arg3[%c0_3, %c0_4] : memref<1x32xf32, #tpu.memory_space<vmem>>, vector<1x32xf32>
    %5 = vector.broadcast %4 : vector<1x32xf32> to vector<64x32xf32>
    %6 = arith.addf %3, %5 : vector<64x32xf32>
    %7 = vector.extract_strided_slice %6 {offsets = [0, 0], sizes = [64, 16], strides = [1, 1]} : vector<64x32xf32> to vector<64x16xf32>
    %8 = vector.extract_strided_slice %6 {offsets = [0, 16], sizes = [64, 16], strides = [1, 1]} : vector<64x32xf32> to vector<64x16xf32>
    %cst_5 = arith.constant 5.000000e-01 : f32
    %9 = vector.broadcast %cst_5 : f32 to vector<64x16xf32>
    %10 = arith.mulf %9, %8 : vector<64x16xf32>
    %11 = math.exp %10 : vector<64x16xf32>
    %12 = vector.shape_cast %8 : vector<64x16xf32> to vector<1x64x16xf32>
    %cst_6 = arith.constant dense<0.000000e+00> : vector<1xf32>
    %13 = vector.multi_reduction <add>, %12, %cst_6 [1, 2] : vector<1x64x16xf32> to vector<1xf32>
    %14 = vector.shape_cast %13 : vector<1xf32> to vector<1x1x1xf32>
    %15 = vector.extract %14[0, 0, 0] : f32 from vector<1x1x1xf32>
    %c0_7 = arith.constant 0 : index
    %c0_8 = arith.constant 0 : index
    %c0_9 = arith.constant 0 : index
    %16 = vector.load %arg1[%c0_7, %c0_8, %c0_9] : memref<4x64x16xf32, #tpu.memory_space<vmem>>, vector<4x64x16xf32>
    %17 = vector.shape_cast %7 : vector<64x16xf32> to vector<1x64x16xf32>
    %18 = vector.shape_cast %11 : vector<64x16xf32> to vector<1x64x16xf32>
    %19 = vector.broadcast %18 : vector<1x64x16xf32> to vector<4x64x16xf32>
    %20 = arith.mulf %19, %16 : vector<4x64x16xf32>
    %21 = vector.broadcast %17 : vector<1x64x16xf32> to vector<4x64x16xf32>
    %22 = arith.addf %21, %20 : vector<4x64x16xf32>
    %23 = vector.shape_cast %22 : vector<4x64x16xf32> to vector<256x16xf32>
    %24 = arith.truncf %23 : vector<256x16xf32> to vector<256x16xbf16>
    %c0_10 = arith.constant 0 : index
    %c0_11 = arith.constant 0 : index
    %25 = vector.load %arg4[%c0_10, %c0_11] : memref<16x32xbf16, #tpu.memory_space<vmem>>, vector<16x32xbf16>
    %cst_12 = arith.constant dense<0.000000e+00> : vector<256x32xf32>
    %26 = tpu.matmul %24, %25, %cst_12 {dimension_numbers = #tpu.dot_dimension_numbers<[1], [0], [0], [1], [0, 0, 1, 1], [], []>} : vector<256x16xbf16>, vector<16x32xbf16>, vector<256x32xf32> -> vector<256x32xf32>
    %c0_13 = arith.constant 0 : index
    %c0_14 = arith.constant 0 : index
    %27 = vector.load %arg5[%c0_13, %c0_14] : memref<1x32xf32, #tpu.memory_space<vmem>>, vector<1x32xf32>
    %28 = vector.broadcast %27 : vector<1x32xf32> to vector<256x32xf32>
    %29 = arith.addf %26, %28 : vector<256x32xf32>
    %30 = vector.shape_cast %0 : vector<64x32xf32> to vector<1x64x32xf32>
    %31 = vector.shape_cast %29 : vector<256x32xf32> to vector<4x64x32xf32>
    %32 = vector.broadcast %30 : vector<1x64x32xf32> to vector<4x64x32xf32>
    %33 = arith.subf %32, %31 : vector<4x64x32xf32>
    %34 = arith.mulf %16, %16 : vector<4x64x16xf32>
    %35 = vector.shape_cast %34 : vector<4x64x16xf32> to vector<1x4x64x16xf32>
    %cst_15 = arith.constant dense<0.000000e+00> : vector<1xf32>
    %36 = vector.multi_reduction <add>, %35, %cst_15 [1, 2, 3] : vector<1x4x64x16xf32> to vector<1xf32>
    %37 = vector.shape_cast %36 : vector<1xf32> to vector<1x1x1x1xf32>
    %38 = vector.extract %37[0, 0, 0, 0] : f32 from vector<1x1x1x1xf32>
    %39 = arith.mulf %22, %22 : vector<4x64x16xf32>
    %40 = vector.shape_cast %39 : vector<4x64x16xf32> to vector<1x4x64x16xf32>
    %cst_16 = arith.constant dense<0.000000e+00> : vector<1xf32>
    %41 = vector.multi_reduction <add>, %40, %cst_16 [1, 2, 3] : vector<1x4x64x16xf32> to vector<1xf32>
    %42 = vector.shape_cast %41 : vector<1xf32> to vector<1x1x1x1xf32>
    %43 = vector.extract %42[0, 0, 0, 0] : f32 from vector<1x1x1x1xf32>
    %44 = arith.mulf %33, %33 : vector<4x64x32xf32>
    %45 = vector.shape_cast %44 : vector<4x64x32xf32> to vector<1x4x64x32xf32>
    %cst_17 = arith.constant dense<0.000000e+00> : vector<1xf32>
    %46 = vector.multi_reduction <add>, %45, %cst_17 [1, 2, 3] : vector<1x4x64x32xf32> to vector<1xf32>
    %47 = vector.shape_cast %46 : vector<1xf32> to vector<1x1x1x1xf32>
    %48 = vector.extract %47[0, 0, 0, 0] : f32 from vector<1x1x1x1xf32>
    %49 = arith.addf %43, %48 : f32
    %50 = arith.subf %49, %38 : f32
    %cst_18 = arith.constant 2.560000e+02 : f32
    %51 = arith.divf %50, %cst_18 : f32
    %cst_19 = arith.constant 6.400000e+01 : f32
    %52 = arith.divf %15, %cst_19 : f32
    %53 = arith.subf %51, %52 : f32
    %cst_20 = arith.constant 58.8120651 : f32
    %54 = arith.addf %53, %cst_20 : f32
    %cst_21 = arith.constant 5.000000e-01 : f32
    %55 = arith.mulf %cst_21, %54 : f32
    %c0_22 = arith.constant 0 : index
    %c0_23 = arith.constant 0 : index
    %56 = memref.load %arg6[%c0_22, %c0_23] : memref<1x1xf32, #tpu.memory_space<smem>>
    memref.store %55, %arg6[%c0_22, %c0_23] : memref<1x1xf32, #tpu.memory_space<smem>>
    return
  }
}

</mosaic_0001>

<llo_original>
// kernel: elbo_loss.1
$region0: #{elbo_loss.1}
  #allocation0 [shape = 'u32[]', space=smem, size = 0x4, offset = 0x4, fixed_abs, tag = 'smem constant byte address 0x4 - core index']
  #allocation1 [shape = 'u32[144,128]{1,0:T(1,128)}', space=vmem, size = 0x12000, scoped, tag = 'internal scratch']
  %s0 = inlined_call_operand.vmem [shape: f32[64,32], index: 0, kind: input, shape index: {}]
  %s1 = inlined_call_operand.vmem [shape: f32[4,64,16], index: 1, kind: input, shape index: {}]
  %s2 = inlined_call_operand.vmem [shape: bf16[32,32], index: 2, kind: input, shape index: {}]
  %s3 = inlined_call_operand.vmem [shape: f32[1,32], index: 3, kind: input, shape index: {}]
  %s4 = inlined_call_operand.vmem [shape: bf16[16,32], index: 4, kind: input, shape index: {}]
  %s5 = inlined_call_operand.vmem [shape: f32[1,32], index: 5, kind: input, shape index: {}]
  %s6 = inlined_call_operand.hbm [shape: f32[1,1], index: 6, kind: output, shape index: {}]
  %s7 = sld [smem:[#allocation0]]
  $region34: #{elbo_loss.1} parent=0
    _
  %s9 = ssub.s32 1, %s7
  %s10 = scalar_select 0, %s9, %s7
  $region1: #{elbo_loss.1} parent=0
    #allocation2 [shape = 'u8[512]{0}', space=smem, size = 0x200, scoped, tag = 'output window, operand 0, single buffered']
    #allocation3 [shape = 's32[1]{0}', space=sflag, size = 0x4, scoped, tag = 'scoped memory for elbo_loss.1']
    %11 = vsyncpa [#allocation3], 0
    // Predicated region
    $region2: #{elbo_loss.1} parent=1 // pred_check
      _
    $region3: #{elbo_loss.1} parent=1 // pred_check_branch
      %13 = sbr.rel (0) target = $region5
    $region4: #{elbo_loss.1} parent=1 // pred_region
      _
    $region5: #{elbo_loss.1} parent=1 // pred_fallthru
      _
    // Predicated region
    $region6: #{elbo_loss.1} parent=1 // pred_check
      _
    $region7: #{elbo_loss.1} parent=1 // pred_check_branch
      %15 = sbr.rel (0) target = $region9
    $region8: #{elbo_loss.1} parent=1 // pred_region
      _
    $region9: #{elbo_loss.1} parent=1 // pred_fallthru
      _
    // Predicated region
    $region10: #{elbo_loss.1} parent=1 // pred_check
      _
    $region11: #{elbo_loss.1} parent=1 // pred_check_branch
      %17 = sbr.rel (0) target = $region13
    $region12: #{elbo_loss.1} parent=1 // pred_region
      _
    $region13: #{elbo_loss.1} parent=1 // pred_fallthru
      _
    // Predicated region
    $region14: #{elbo_loss.1} parent=1 // pred_check
      _
    $region15: #{elbo_loss.1} parent=1 // pred_check_branch
      %19 = sbr.rel (0) target = $region17
    $region16: #{elbo_loss.1} parent=1 // pred_region
      _
    $region17: #{elbo_loss.1} parent=1 // pred_fallthru
      _
    // Predicated region
    $region18: #{elbo_loss.1} parent=1 // pred_check
      _
    $region19: #{elbo_loss.1} parent=1 // pred_check_branch
      %21 = sbr.rel (0) target = $region21
    $region20: #{elbo_loss.1} parent=1 // pred_region
      _
    $region21: #{elbo_loss.1} parent=1 // pred_fallthru
      _
    // Predicated region
    $region22: #{elbo_loss.1} parent=1 // pred_check
      _
    $region23: #{elbo_loss.1} parent=1 // pred_check_branch
      %23 = sbr.rel (0) target = $region25
    $region24: #{elbo_loss.1} parent=1 // pred_region
      _
    $region25: #{elbo_loss.1} parent=1 // pred_fallthru
      _
    %v25 = vld [vmem:[%s0] sm:$0xff]
    %v26 = vld [vmem:[%s0 + $0x8] sm:$0xff]
    %v27 = vld [vmem:[%s0 + $0x10] sm:$0xff]
    %v28 = vld [vmem:[%s0 + $0x18] sm:$0xff]
    %v29 = vld [vmem:[%s0 + $0x20] sm:$0xff]
    %v30 = vld [vmem:[%s0 + $0x28] sm:$0xff]
    %v31 = vld [vmem:[%s0 + $0x30] sm:$0xff]
    %v32 = vld [vmem:[%s0 + $0x38] sm:$0xff]
    %v33 = vpack.c.bf16 %v26, %v25
    %v34 = vpack.c.bf16 %v28, %v27
    %v35 = vpack.c.bf16 %v30, %v29
    %v36 = vpack.c.bf16 %v32, %v31
    %v37 = vld [vmem:[%s2] sm:$0xf]
    %v38 = vld [vmem:[%s2 + $0x4] sm:$0xf]
    %v39 = vld [vmem:[%s2 + $0x8] sm:$0xf]
    %v40 = vld [vmem:[%s2 + $0xc] sm:$0xf]
    %v41 = vld [vmem:[%s3] sm:$0x1]
    %v43 = vlaneseq
    %v44 = vshrl.u32 %v43, 7
    %v45 = vsub.s32 0, %v44
    %v46 = vrot.slane %v41, %v45
    %v52 = vunpack.c.l.b16 %v37
    %v53 = vunpack.c.l.b16 %v38
    %v54 = vunpack.c.l.b16 %v39
    %v55 = vunpack.c.l.b16 %v40
    %v56 = vpack.c.b16 %v53, %v52
    %v57 = vpack.c.b16 %v55, %v54
    %vm60 = vcmask 261120
    %v62 = vsel %vm60, %v33, 0
    %v65 = vsel %vm60, %v34, 0
    %v68 = vsel %vm60, %v35, 0
    %v71 = vsel %vm60, %v36, 0
    %73 = vmatprep.subr.bf16.mxu0 0
    %74 = vmatpush1.bf16.msra.mxu0 %v56
    %75 = vmatprep.subr.bf16.mxu0 0
    %76 = vmatpush1.bf16.msra.mxu0 %v57
    %77 = vmatprep.subr.bf16.mxu0 0
    %78 = vmatpush1.bf16.msra.mxu0 0
    %79 = vmatprep.subr.bf16.mxu0 0
    %80 = vmatpush1.bf16.msra.mxu0 0
    %81 = vmatprep.subr.bf16.mxu0 0
    %82 = vmatpush1.bf16.msra.mxu0 0
    %83 = vmatprep.subr.bf16.mxu0 0
    %84 = vmatpush1.bf16.msra.mxu0 0
    %85 = vmatprep.subr.bf16.mxu0 0
    %86 = vmatpush1.bf16.msra.mxu0 0
    %87 = vmatprep.subr.bf16.mxu0 0
    %88 = vmatpush1.bf16.msra.mxu0 0
    %89 = vmatprep.subr.bf16.mxu0 0
    %90 = vmatpush1.bf16.msra.mxu0 0
    %91 = vmatprep.subr.bf16.mxu0 0
    %92 = vmatpush1.bf16.msra.mxu0 0
    %93 = vmatprep.subr.bf16.mxu0 0
    %94 = vmatpush1.bf16.msra.mxu0 0
    %95 = vmatprep.subr.bf16.mxu0 0
    %96 = vmatpush1.bf16.msra.mxu0 0
    %97 = vmatprep.subr.bf16.mxu0 0
    %98 = vmatpush1.bf16.msra.mxu0 0
    %99 = vmatprep.subr.bf16.mxu0 0
    %100 = vmatpush1.bf16.msra.mxu0 0
    %101 = vmatprep.subr.bf16.mxu0 0
    %102 = vmatpush1.bf16.msra.mxu0 0
    %103 = vmatprep.subr.bf16.mxu0 0
    %104 = vmatpush1.bf16.msra.mxu0 0
    %105 = vmatprep.mubr.bf16.mxu0 0
    %106 = vmatmul.mubr.bf16.gmra.mrb[0].mxu0 %v62
    %v107 = vpop.f32.mrb[0].mxu0
    %v108 = vadd.f32 %v46, %v107
    %v109 = vpop.f32.mrb[0].mxu0
    %v110 = vpop.f32.mrb[0].mxu0
    %v111 = vadd.f32 %v46, %v110
    %v112 = vpop.f32.mrb[0].mxu0
    %113 = vmatprep.mubr.bf16.mxu0 0
    %114 = vmatmul.mubr.bf16.gmra.mrb[0].mxu0 %v65
    %v115 = vpop.f32.mrb[0].mxu0
    %v116 = vadd.f32 %v46, %v115
    %v117 = vpop.f32.mrb[0].mxu0
    %v118 = vpop.f32.mrb[0].mxu0
    %v119 = vadd.f32 %v46, %v118
    %v120 = vpop.f32.mrb[0].mxu0
    %121 = vmatprep.mubr.bf16.mxu0 0
    %122 = vmatmul.mubr.bf16.gmra.mrb[0].mxu0 %v68
    %v123 = vpop.f32.mrb[0].mxu0
    %v124 = vadd.f32 %v46, %v123
    %v125 = vpop.f32.mrb[0].mxu0
    %v126 = vpop.f32.mrb[0].mxu0
    %v127 = vadd.f32 %v46, %v126
    %v128 = vpop.f32.mrb[0].mxu0
    %129 = vmatprep.mubr.bf16.mxu0 0
    %130 = vmatmul.mubr.bf16.gmra.mrb[0].mxu0 %v71
    %v131 = vpop.f32.mrb[0].mxu0
    %v132 = vadd.f32 %v46, %v131
    %v133 = vpop.f32.mrb[0].mxu0
    %v134 = vpop.f32.mrb[0].mxu0
    %v135 = vadd.f32 %v46, %v134
    %v136 = vpop.f32.mrb[0].mxu0
    %137 = vdwg.mxu0
    %v138 = vmul.f32 %v108, 0.5
    %v139 = vmul.f32 %v111, 0.5
    %v140 = vmul.f32 %v116, 0.5
    %v141 = vmul.f32 %v119, 0.5
    %v142 = vmul.f32 %v124, 0.5
    %v143 = vmul.f32 %v127, 0.5
    %v144 = vmul.f32 %v132, 0.5
    %v145 = vmul.f32 %v135, 0.5
    %v146 = vmul.f32 %v138, 1.442695
    %v147 = vpow.pop %v146
    %v148 = vmul.f32 %v139, 1.442695
    %v149 = vpow.pop %v148
    %v150 = vmul.f32 %v140, 1.442695
    %v151 = vpow.pop %v150
    %v152 = vmul.f32 %v141, 1.442695
    %v153 = vpow.pop %v152
    %v154 = vmul.f32 %v142, 1.442695
    %v155 = vpow.pop %v154
    %v156 = vmul.f32 %v143, 1.442695
    %v157 = vpow.pop %v156
    %v158 = vmul.f32 %v144, 1.442695
    %v159 = vpow.pop %v158
    %v160 = vmul.f32 %v145, 1.442695
    %v161 = vpow.pop %v160
    %170 = vrot.lane.b32.xlu0 %v108, 112
    %v171 = vpop.permute.xlu0 %170
    %172 = vrot.lane.b32.xlu0 %v111, 112
    %v173 = vpop.permute.xlu0 %172
    %174 = vrot.lane.b32.xlu0 %v116, 112
    %v175 = vpop.permute.xlu0 %174
    %176 = vrot.lane.b32.xlu0 %v119, 112
    %v177 = vpop.permute.xlu0 %176
    %178 = vrot.lane.b32.xlu0 %v124, 112
    %v179 = vpop.permute.xlu0 %178
    %180 = vrot.lane.b32.xlu0 %v127, 112
    %v181 = vpop.permute.xlu0 %180
    %182 = vrot.lane.b32.xlu0 %v132, 112
    %v183 = vpop.permute.xlu0 %182
    %184 = vrot.lane.b32.xlu0 %v135, 112
    %v185 = vpop.permute.xlu0 %184
    %vm194 = vcmask 130048
    %v195 = vsel %vm194, %v171, 0.0
    %v196 = vsel %vm194, %v173, 0.0
    %v197 = vadd.f32 %v195, %v196
    %v198 = vsel %vm194, %v175, 0.0
    %v199 = vadd.f32 %v197, %v198
    %v200 = vsel %vm194, %v177, 0.0
    %v201 = vadd.f32 %v199, %v200
    %v202 = vsel %vm194, %v179, 0.0
    %v203 = vadd.f32 %v201, %v202
    %v204 = vsel %vm194, %v181, 0.0
    %v205 = vadd.f32 %v203, %v204
    %v206 = vsel %vm194, %v183, 0.0
    %v207 = vadd.f32 %v205, %v206
    %v208 = vsel %vm194, %v185, 0.0
    %v209 = vadd.f32 %v207, %v208
    %210 = vadd.xlane.f32.xlu0 %v209
    %v211 = vpop.xlane.xlu0 %210
    %v212 = vrot.slane %v211, 4
    %v213 = vadd.f32 %v211, %v212
    %v214 = vrot.slane %v213, 2
    %v215 = vadd.f32 %v213, %v214
    %v216 = vrot.slane %v215, 1
    %v217 = vadd.f32 %v215, %v216
    %s218 = vtos %v217
    %v219 = vld [vmem:[%s1] sm:$0xff]
    %v220 = vld [vmem:[%s1 + $0x8] sm:$0xff]
    %v221 = vld [vmem:[%s1 + $0x10] sm:$0xff]
    %v222 = vld [vmem:[%s1 + $0x18] sm:$0xff]
    %v223 = vld [vmem:[%s1 + $0x20] sm:$0xff]
    %v224 = vld [vmem:[%s1 + $0x28] sm:$0xff]
    %v225 = vld [vmem:[%s1 + $0x30] sm:$0xff]
    %v226 = vld [vmem:[%s1 + $0x38] sm:$0xff]
    %v227 = vld [vmem:[%s1 + $0x40] sm:$0xff]
    %v228 = vld [vmem:[%s1 + $0x48] sm:$0xff]
    %v229 = vld [vmem:[%s1 + $0x50] sm:$0xff]
    %v230 = vld [vmem:[%s1 + $0x58] sm:$0xff]
    %v231 = vld [vmem:[%s1 + $0x60] sm:$0xff]
    %v232 = vld [vmem:[%s1 + $0x68] sm:$0xff]
    %v233 = vld [vmem:[%s1 + $0x70] sm:$0xff]
    %v234 = vld [vmem:[%s1 + $0x78] sm:$0xff]
    %v235 = vld [vmem:[%s1 + $0x80] sm:$0xff]
    %v236 = vld [vmem:[%s1 + $0x88] sm:$0xff]
    %v237 = vld [vmem:[%s1 + $0x90] sm:$0xff]
    %v238 = vld [vmem:[%s1 + $0x98] sm:$0xff]
    %v239 = vld [vmem:[%s1 + $0xa0] sm:$0xff]
    %v240 = vld [vmem:[%s1 + $0xa8] sm:$0xff]
    %v241 = vld [vmem:[%s1 + $0xb0] sm:$0xff]
    %v242 = vld [vmem:[%s1 + $0xb8] sm:$0xff]
    %v243 = vld [vmem:[%s1 + $0xc0] sm:$0xff]
    %v244 = vld [vmem:[%s1 + $0xc8] sm:$0xff]
    %v245 = vld [vmem:[%s1 + $0xd0] sm:$0xff]
    %v246 = vld [vmem:[%s1 + $0xd8] sm:$0xff]
    %v247 = vld [vmem:[%s1 + $0xe0] sm:$0xff]
    %v248 = vld [vmem:[%s1 + $0xe8] sm:$0xff]
    %v249 = vld [vmem:[%s1 + $0xf0] sm:$0xff]
    %v250 = vld [vmem:[%s1 + $0xf8] sm:$0xff]
    %283 = vrot.lane.b32.xlu0 %v219, 16
    %v284 = vpop.permute.xlu0 %283
    %285 = vrot.lane.b32.xlu0 %v220, 16
    %v286 = vpop.permute.xlu0 %285
    %287 = vrot.lane.b32.xlu0 %v221, 16
    %v288 = vpop.permute.xlu0 %287
    %289 = vrot.lane.b32.xlu0 %v222, 16
    %v290 = vpop.permute.xlu0 %289
    %291 = vrot.lane.b32.xlu0 %v223, 16
    %v292 = vpop.permute.xlu0 %291
    %293 = vrot.lane.b32.xlu0 %v224, 16
    %v294 = vpop.permute.xlu0 %293
    %295 = vrot.lane.b32.xlu0 %v225, 16
    %v296 = vpop.permute.xlu0 %295
    %297 = vrot.lane.b32.xlu0 %v226, 16
    %v298 = vpop.permute.xlu0 %297
    %299 = vrot.lane.b32.xlu0 %v227, 16
    %v300 = vpop.permute.xlu0 %299
    %301 = vrot.lane.b32.xlu0 %v228, 16
    %v302 = vpop.permute.xlu0 %301
    %303 = vrot.lane.b32.xlu0 %v229, 16
    %v304 = vpop.permute.xlu0 %303
    %305 = vrot.lane.b32.xlu0 %v230, 16
    %v306 = vpop.permute.xlu0 %305
    %307 = vrot.lane.b32.xlu0 %v231, 16
    %v308 = vpop.permute.xlu0 %307
    %309 = vrot.lane.b32.xlu0 %v232, 16
    %v310 = vpop.permute.xlu0 %309
    %311 = vrot.lane.b32.xlu0 %v233, 16
    %v312 = vpop.permute.xlu0 %311
    %313 = vrot.lane.b32.xlu0 %v234, 16
    %v314 = vpop.permute.xlu0 %313
    %315 = vrot.lane.b32.xlu0 %v235, 16
    %v316 = vpop.permute.xlu0 %315
    %317 = vrot.lane.b32.xlu0 %v236, 16
    %v318 = vpop.permute.xlu0 %317
    %319 = vrot.lane.b32.xlu0 %v237, 16
    %v320 = vpop.permute.xlu0 %319
    %321 = vrot.lane.b32.xlu0 %v238, 16
    %v322 = vpop.permute.xlu0 %321
    %323 = vrot.lane.b32.xlu0 %v239, 16
    %v324 = vpop.permute.xlu0 %323
    %325 = vrot.lane.b32.xlu0 %v240, 16
    %v326 = vpop.permute.xlu0 %325
    %327 = vrot.lane.b32.xlu0 %v241, 16
    %v328 = vpop.permute.xlu0 %327
    %329 = vrot.lane.b32.xlu0 %v242, 16
    %v330 = vpop.permute.xlu0 %329
    %331 = vrot.lane.b32.xlu0 %v243, 16
    %v332 = vpop.permute.xlu0 %331
    %333 = vrot.lane.b32.xlu0 %v244, 16
    %v334 = vpop.permute.xlu0 %333
    %335 = vrot.lane.b32.xlu0 %v245, 16
    %v336 = vpop.permute.xlu0 %335
    %337 = vrot.lane.b32.xlu0 %v246, 16
    %v338 = vpop.permute.xlu0 %337
    %339 = vrot.lane.b32.xlu0 %v247, 16
    %v340 = vpop.permute.xlu0 %339
    %341 = vrot.lane.b32.xlu0 %v248, 16
    %v342 = vpop.permute.xlu0 %341
    %343 = vrot.lane.b32.xlu0 %v249, 16
    %v344 = vpop.permute.xlu0 %343
    %345 = vrot.lane.b32.xlu0 %v250, 16
    %v346 = vpop.permute.xlu0 %345
    %v379 = vmul.f32 %v147, %v284
    %v380 = vmul.f32 %v149, %v286
    %v381 = vmul.f32 %v151, %v288
    %v382 = vmul.f32 %v153, %v290
    %v383 = vmul.f32 %v155, %v292
    %v384 = vmul.f32 %v157, %v294
    %v385 = vmul.f32 %v159, %v296
    %v386 = vmul.f32 %v161, %v298
    %v387 = vmul.f32 %v147, %v300
    %v388 = vmul.f32 %v149, %v302
    %v389 = vmul.f32 %v151, %v304
    %v390 = vmul.f32 %v153, %v306
    %v391 = vmul.f32 %v155, %v308
    %v392 = vmul.f32 %v157, %v310
    %v393 = vmul.f32 %v159, %v312
    %v394 = vmul.f32 %v161, %v314
    %v395 = vmul.f32 %v147, %v316
    %v396 = vmul.f32 %v149, %v318
    %v397 = vmul.f32 %v151, %v320
    %v398 = vmul.f32 %v153, %v322
    %v399 = vmul.f32 %v155, %v324
    %v400 = vmul.f32 %v157, %v326
    %v401 = vmul.f32 %v159, %v328
    %v402 = vmul.f32 %v161, %v330
    %v403 = vmul.f32 %v147, %v332
    %v404 = vmul.f32 %v149, %v334
    %v405 = vmul.f32 %v151, %v336
    %v406 = vmul.f32 %v153, %v338
    %v407 = vmul.f32 %v155, %v340
    %v408 = vmul.f32 %v157, %v342
    %v409 = vmul.f32 %v159, %v344
    %v410 = vmul.f32 %v161, %v346
    %443 = vrot.lane.b32.xlu0 %v379, 112
    %v444 = vpop.permute.xlu0 %443
    %445 = vrot.lane.b32.xlu0 %v380, 112
    %v446 = vpop.permute.xlu0 %445
    %447 = vrot.lane.b32.xlu0 %v381, 112
    %v448 = vpop.permute.xlu0 %447
    %449 = vrot.lane.b32.xlu0 %v382, 112
    %v450 = vpop.permute.xlu0 %449
    %451 = vrot.lane.b32.xlu0 %v383, 112
    %v452 = vpop.permute.xlu0 %451
    %453 = vrot.lane.b32.xlu0 %v384, 112
    %v454 = vpop.permute.xlu0 %453
    %455 = vrot.lane.b32.xlu0 %v385, 112
    %v456 = vpop.permute.xlu0 %455
    %457 = vrot.lane.b32.xlu0 %v386, 112
    %v458 = vpop.permute.xlu0 %457
    %459 = vrot.lane.b32.xlu0 %v387, 112
    %v460 = vpop.permute.xlu0 %459
    %461 = vrot.lane.b32.xlu0 %v388, 112
    %v462 = vpop.permute.xlu0 %461
    %463 = vrot.lane.b32.xlu0 %v389, 112
    %v464 = vpop.permute.xlu0 %463
    %465 = vrot.lane.b32.xlu0 %v390, 112
    %v466 = vpop.permute.xlu0 %465
    %467 = vrot.lane.b32.xlu0 %v391, 112
    %v468 = vpop.permute.xlu0 %467
    %469 = vrot.lane.b32.xlu0 %v392, 112
    %v470 = vpop.permute.xlu0 %469
    %471 = vrot.lane.b32.xlu0 %v393, 112
    %v472 = vpop.permute.xlu0 %471
    %473 = vrot.lane.b32.xlu0 %v394, 112
    %v474 = vpop.permute.xlu0 %473
    %475 = vrot.lane.b32.xlu0 %v395, 112
    %v476 = vpop.permute.xlu0 %475
    %477 = vrot.lane.b32.xlu0 %v396, 112
    %v478 = vpop.permute.xlu0 %477
    %479 = vrot.lane.b32.xlu0 %v397, 112
    %v480 = vpop.permute.xlu0 %479
    %481 = vrot.lane.b32.xlu0 %v398, 112
    %v482 = vpop.permute.xlu0 %481
    %483 = vrot.lane.b32.xlu0 %v399, 112
    %v484 = vpop.permute.xlu0 %483
    %485 = vrot.lane.b32.xlu0 %v400, 112
    %v486 = vpop.permute.xlu0 %485
    %487 = vrot.lane.b32.xlu0 %v401, 112
    %v488 = vpop.permute.xlu0 %487
    %489 = vrot.lane.b32.xlu0 %v402, 112
    %v490 = vpop.permute.xlu0 %489
    %491 = vrot.lane.b32.xlu0 %v403, 112
    %v492 = vpop.permute.xlu0 %491
    %493 = vrot.lane.b32.xlu0 %v404, 112
    %v494 = vpop.permute.xlu0 %493
    %495 = vrot.lane.b32.xlu0 %v405, 112
    %v496 = vpop.permute.xlu0 %495
    %497 = vrot.lane.b32.xlu0 %v406, 112
    %v498 = vpop.permute.xlu0 %497
    %499 = vrot.lane.b32.xlu0 %v407, 112
    %v500 = vpop.permute.xlu0 %499
    %501 = vrot.lane.b32.xlu0 %v408, 112
    %v502 = vpop.permute.xlu0 %501
    %503 = vrot.lane.b32.xlu0 %v409, 112
    %v504 = vpop.permute.xlu0 %503
    %505 = vrot.lane.b32.xlu0 %v410, 112
    %v506 = vpop.permute.xlu0 %505
    %v539 = vadd.f32 %v108, %v444
    %v540 = vadd.f32 %v111, %v446
    %v541 = vadd.f32 %v116, %v448
    %v542 = vadd.f32 %v119, %v450
    %v543 = vadd.f32 %v124, %v452
    %v544 = vadd.f32 %v127, %v454
    %v545 = vadd.f32 %v132, %v456
    %v546 = vadd.f32 %v135, %v458
    %v547 = vadd.f32 %v108, %v460
    %v548 = vadd.f32 %v111, %v462
    %v549 = vadd.f32 %v116, %v464
    %v550 = vadd.f32 %v119, %v466
    %v551 = vadd.f32 %v124, %v468
    %v552 = vadd.f32 %v127, %v470
    %v553 = vadd.f32 %v132, %v472
    %v554 = vadd.f32 %v135, %v474
    %v555 = vadd.f32 %v108, %v476
    %v556 = vadd.f32 %v111, %v478
    %v557 = vadd.f32 %v116, %v480
    %v558 = vadd.f32 %v119, %v482
    %v559 = vadd.f32 %v124, %v484
    %v560 = vadd.f32 %v127, %v486
    %v561 = vadd.f32 %v132, %v488
    %v562 = vadd.f32 %v135, %v490
    %v563 = vadd.f32 %v108, %v492
    %v564 = vadd.f32 %v111, %v494
    %v565 = vadd.f32 %v116, %v496
    %v566 = vadd.f32 %v119, %v498
    %v567 = vadd.f32 %v124, %v500
    %v568 = vadd.f32 %v127, %v502
    %v569 = vadd.f32 %v132, %v504
    %v570 = vadd.f32 %v135, %v506
    %v571 = vpack.c.bf16 %v540, %v539
    %v572 = vpack.c.bf16 %v542, %v541
    %v573 = vpack.c.bf16 %v544, %v543
    %v574 = vpack.c.bf16 %v546, %v545
    %v575 = vpack.c.bf16 %v548, %v547
    %v576 = vpack.c.bf16 %v550, %v549
    %v577 = vpack.c.bf16 %v552, %v551
    %v578 = vpack.c.bf16 %v554, %v553
    %v579 = vpack.c.bf16 %v556, %v555
    %v580 = vpack.c.bf16 %v558, %v557
    %v581 = vpack.c.bf16 %v560, %v559
    %v582 = vpack.c.bf16 %v562, %v561
    %v583 = vpack.c.bf16 %v564, %v563
    %v584 = vpack.c.bf16 %v566, %v565
    %v585 = vpack.c.bf16 %v568, %v567
    %v586 = vpack.c.bf16 %v570, %v569
    %v587 = vld [vmem:[%s4] sm:$0xf]
    %v588 = vld [vmem:[%s4 + $0x4] sm:$0xf]
    %v589 = vld [vmem:[%s5] sm:$0x1]
    %v591 = vlaneseq
    %v592 = vshrl.u32 %v591, 7
    %v593 = vsub.s32 0, %v592
    %v594 = vrot.slane %v589, %v593
    %v598 = vunpack.c.l.b16 %v587
    %v599 = vunpack.c.l.b16 %v588
    %v600 = vpack.c.b16 %v599, %v598
    %v603 = vsel %vm194, %v571, 0
    %v606 = vsel %vm194, %v572, 0
    %v609 = vsel %vm194, %v573, 0
    %v612 = vsel %vm194, %v574, 0
    %v615 = vsel %vm194, %v575, 0
    %v618 = vsel %vm194, %v576, 0
    %v621 = vsel %vm194, %v577, 0
    %v624 = vsel %vm194, %v578, 0
    %v627 = vsel %vm194, %v579, 0
    %v630 = vsel %vm194, %v580, 0
    %v633 = vsel %vm194, %v581, 0
    %v636 = vsel %vm194, %v582, 0
    %v639 = vsel %vm194, %v583, 0
    %v642 = vsel %vm194, %v584, 0
    %v645 = vsel %vm194, %v585, 0
    %v648 = vsel %vm194, %v586, 0
    %650 = vmatprep.subr.bf16.mxu0 0
    %651 = vmatpush1.bf16.msra.mxu0 %v600
    %652 = vmatprep.subr.bf16.mxu0 0
    %653 = vmatpush1.bf16.msra.mxu0 0
    %654 = vmatprep.subr.bf16.mxu0 0
    %655 = vmatpush1.bf16.msra.mxu0 0
    %656 = vmatprep.subr.bf16.mxu0 0
    %657 = vmatpush1.bf16.msra.mxu0 0
    %658 = vmatprep.subr.bf16.mxu0 0
    %659 = vmatpush1.bf16.msra.mxu0 0
    %660 = vmatprep.subr.bf16.mxu0 0
    %661 = vmatpush1.bf16.msra.mxu0 0
    %662 = vmatprep.subr.bf16.mxu0 0
    %663 = vmatpush1.bf16.msra.mxu0 0
    %664 = vmatprep.subr.bf16.mxu0 0
    %665 = vmatpush1.bf16.msra.mxu0 0
    %666 = vmatprep.subr.bf16.mxu0 0
    %667 = vmatpush1.bf16.msra.mxu0 0
    %668 = vmatprep.subr.bf16.mxu0 0
    %669 = vmatpush1.bf16.msra.mxu0 0
    %670 = vmatprep.subr.bf16.mxu0 0
    %671 = vmatpush1.bf16.msra.mxu0 0
    %672 = vmatprep.subr.bf16.mxu0 0
    %673 = vmatpush1.bf16.msra.mxu0 0
    %674 = vmatprep.subr.bf16.mxu0 0
    %675 = vmatpush1.bf16.msra.mxu0 0
    %676 = vmatprep.subr.bf16.mxu0 0
    %677 = vmatpush1.bf16.msra.mxu0 0
    %678 = vmatprep.subr.bf16.mxu0 0
    %679 = vmatpush1.bf16.msra.mxu0 0
    %680 = vmatprep.subr.bf16.mxu0 0
    %681 = vmatpush1.bf16.msra.mxu0 0
    %682 = vmatprep.mubr.bf16.mxu0 0
    %683 = vmatmul.mubr.bf16.gmra.mrb[0].mxu0 %v603
    %v684 = vpop.f32.mrb[0].mxu0
    %v685 = vadd.f32 %v594, %v684
    %v686 = vpop.f32.mrb[0].mxu0
    %v687 = vpop.f32.mrb[0].mxu0
    %v688 = vadd.f32 %v594, %v687
    %v689 = vpop.f32.mrb[0].mxu0
    %690 = vmatprep.mubr.bf16.mxu0 0
    %691 = vmatmul.mubr.bf16.gmra.mrb[0].mxu0 %v606
    %v692 = vpop.f32.mrb[0].mxu0
    %v693 = vadd.f32 %v594, %v692
    %v694 = vpop.f32.mrb[0].mxu0
    %v695 = vpop.f32.mrb[0].mxu0
    %v696 = vadd.f32 %v594, %v695
    %v697 = vpop.f32.mrb[0].mxu0
    %698 = vmatprep.mubr.bf16.mxu0 0
    %699 = vmatmul.mubr.bf16.gmra.mrb[0].mxu0 %v609
    %v700 = vpop.f32.mrb[0].mxu0
    %v701 = vadd.f32 %v594, %v700
    %v702 = vpop.f32.mrb[0].mxu0
    %v703 = vpop.f32.mrb[0].mxu0
    %v704 = vadd.f32 %v594, %v703
    %v705 = vpop.f32.mrb[0].mxu0
    %706 = vmatprep.mubr.bf16.mxu0 0
    %707 = vmatmul.mubr.bf16.gmra.mrb[0].mxu0 %v612
    %v708 = vpop.f32.mrb[0].mxu0
    %v709 = vadd.f32 %v594, %v708
    %v710 = vpop.f32.mrb[0].mxu0
    %v711 = vpop.f32.mrb[0].mxu0
    %v712 = vadd.f32 %v594, %v711
    %v713 = vpop.f32.mrb[0].mxu0
    %714 = vmatprep.mubr.bf16.mxu0 0
    %715 = vmatmul.mubr.bf16.gmra.mrb[0].mxu0 %v615
    %v716 = vpop.f32.mrb[0].mxu0
    %v717 = vadd.f32 %v594, %v716
    %v718 = vpop.f32.mrb[0].mxu0
    %v719 = vpop.f32.mrb[0].mxu0
    %v720 = vadd.f32 %v594, %v719
    %v721 = vpop.f32.mrb[0].mxu0
    %722 = vmatprep.mubr.bf16.mxu0 0
    %723 = vmatmul.mubr.bf16.gmra.mrb[0].mxu0 %v618
    %v724 = vpop.f32.mrb[0].mxu0
    %v725 = vadd.f32 %v594, %v724
    %v726 = vpop.f32.mrb[0].mxu0
    %v727 = vpop.f32.mrb[0].mxu0
    %v728 = vadd.f32 %v594, %v727
    %v729 = vpop.f32.mrb[0].mxu0
    %730 = vmatprep.mubr.bf16.mxu0 0
    %731 = vmatmul.mubr.bf16.gmra.mrb[0].mxu0 %v621
    %v732 = vpop.f32.mrb[0].mxu0
    %v733 = vadd.f32 %v594, %v732
    %v734 = vpop.f32.mrb[0].mxu0
    %v735 = vpop.f32.mrb[0].mxu0
    %v736 = vadd.f32 %v594, %v735
    %v737 = vpop.f32.mrb[0].mxu0
    %738 = vmatprep.mubr.bf16.mxu0 0
    %739 = vmatmul.mubr.bf16.gmra.mrb[0].mxu0 %v624
    %v740 = vpop.f32.mrb[0].mxu0
    %v741 = vadd.f32 %v594, %v740
    %v742 = vpop.f32.mrb[0].mxu0
    %v743 = vpop.f32.mrb[0].mxu0
    %v744 = vadd.f32 %v594, %v743
    %v745 = vpop.f32.mrb[0].mxu0
    %746 = vmatprep.mubr.bf16.mxu0 0
    %747 = vmatmul.mubr.bf16.gmra.mrb[0].mxu0 %v627
    %v748 = vpop.f32.mrb[0].mxu0
    %v749 = vadd.f32 %v594, %v748
    %v750 = vpop.f32.mrb[0].mxu0
    %v751 = vpop.f32.mrb[0].mxu0
    %v752 = vadd.f32 %v594, %v751
    %v753 = vpop.f32.mrb[0].mxu0
    %754 = vmatprep.mubr.bf16.mxu0 0
    %755 = vmatmul.mubr.bf16.gmra.mrb[0].mxu0 %v630
    %v756 = vpop.f32.mrb[0].mxu0
    %v757 = vadd.f32 %v594, %v756
    %v758 = vpop.f32.mrb[0].mxu0
    %v759 = vpop.f32.mrb[0].mxu0
    %v760 = vadd.f32 %v594, %v759
    %v761 = vpop.f32.mrb[0].mxu0
    %762 = vmatprep.mubr.bf16.mxu0 0
    %763 = vmatmul.mubr.bf16.gmra.mrb[0].mxu0 %v633
    %v764 = vpop.f32.mrb[0].mxu0
    %v765 = vadd.f32 %v594, %v764
    %v766 = vpop.f32.mrb[0].mxu0
    %v767 = vpop.f32.mrb[0].mxu0
    %v768 = vadd.f32 %v594, %v767
    %v769 = vpop.f32.mrb[0].mxu0
    %770 = vmatprep.mubr.bf16.mxu0 0
    %771 = vmatmul.mubr.bf16.gmra.mrb[0].mxu0 %v636
    %v772 = vpop.f32.mrb[0].mxu0
    %v773 = vadd.f32 %v594, %v772
    %v774 = vpop.f32.mrb[0].mxu0
    %v775 = vpop.f32.mrb[0].mxu0
    %v776 = vadd.f32 %v594, %v775
    %v777 = vpop.f32.mrb[0].mxu0
    %778 = vmatprep.mubr.bf16.mxu0 0
    %779 = vmatmul.mubr.bf16.gmra.mrb[0].mxu0 %v639
    %v780 = vpop.f32.mrb[0].mxu0
    %v781 = vadd.f32 %v594, %v780
    %v782 = vpop.f32.mrb[0].mxu0
    %v783 = vpop.f32.mrb[0].mxu0
    %v784 = vadd.f32 %v594, %v783
    %v785 = vpop.f32.mrb[0].mxu0
    %786 = vmatprep.mubr.bf16.mxu0 0
    %787 = vmatmul.mubr.bf16.gmra.mrb[0].mxu0 %v642
    %v788 = vpop.f32.mrb[0].mxu0
    %v789 = vadd.f32 %v594, %v788
    %v790 = vpop.f32.mrb[0].mxu0
    %v791 = vpop.f32.mrb[0].mxu0
    %v792 = vadd.f32 %v594, %v791
    %v793 = vpop.f32.mrb[0].mxu0
    %794 = vmatprep.mubr.bf16.mxu0 0
    %795 = vmatmul.mubr.bf16.gmra.mrb[0].mxu0 %v645
    %v796 = vpop.f32.mrb[0].mxu0
    %v797 = vadd.f32 %v594, %v796
    %v798 = vpop.f32.mrb[0].mxu0
    %v799 = vpop.f32.mrb[0].mxu0
    %v800 = vadd.f32 %v594, %v799
    %v801 = vpop.f32.mrb[0].mxu0
    %802 = vmatprep.mubr.bf16.mxu0 0
    %803 = vmatmul.mubr.bf16.gmra.mrb[0].mxu0 %v648
    %v804 = vpop.f32.mrb[0].mxu0
    %v805 = vadd.f32 %v594, %v804
    %v806 = vpop.f32.mrb[0].mxu0
    %v807 = vpop.f32.mrb[0].mxu0
    %v808 = vadd.f32 %v594, %v807
    %v809 = vpop.f32.mrb[0].mxu0
    %810 = vdwg.mxu0
    %v811 = vsub.f32 %v25, %v685
    %v812 = vsub.f32 %v26, %v688
    %v813 = vsub.f32 %v27, %v693
    %v814 = vsub.f32 %v28, %v696
    %v815 = vsub.f32 %v29, %v701
    %v816 = vsub.f32 %v30, %v704
    %v817 = vsub.f32 %v31, %v709
    %v818 = vsub.f32 %v32, %v712
    %v819 = vsub.f32 %v25, %v717
    %v820 = vsub.f32 %v26, %v720
    %v821 = vsub.f32 %v27, %v725
    %v822 = vsub.f32 %v28, %v728
    %v823 = vsub.f32 %v29, %v733
    %v824 = vsub.f32 %v30, %v736
    %v825 = vsub.f32 %v31, %v741
    %v826 = vsub.f32 %v32, %v744
    %v827 = vsub.f32 %v25, %v749
    %v828 = vsub.f32 %v26, %v752
    %v829 = vsub.f32 %v27, %v757
    %v830 = vsub.f32 %v28, %v760
    %v831 = vsub.f32 %v29, %v765
    %v832 = vsub.f32 %v30, %v768
    %v833 = vsub.f32 %v31, %v773
    %v834 = vsub.f32 %v32, %v776
    %v835 = vsub.f32 %v25, %v781
    %v836 = vsub.f32 %v26, %v784
    %v837 = vsub.f32 %v27, %v789
    %v838 = vsub.f32 %v28, %v792
    %v839 = vsub.f32 %v29, %v797
    %v840 = vsub.f32 %v30, %v800
    %v841 = vsub.f32 %v31, %v805
    %v842 = vsub.f32 %v32, %v808
    %v843 = vmul.f32 %v219, %v219
    %v844 = vmul.f32 %v220, %v220
    %v845 = vmul.f32 %v221, %v221
    %v846 = vmul.f32 %v222, %v222
    %v847 = vmul.f32 %v223, %v223
    %v848 = vmul.f32 %v224, %v224
    %v849 = vmul.f32 %v225, %v225
    %v850 = vmul.f32 %v226, %v226
    %v851 = vmul.f32 %v227, %v227
    %v852 = vmul.f32 %v228, %v228
    %v853 = vmul.f32 %v229, %v229
    %v854 = vmul.f32 %v230, %v230
    %v855 = vmul.f32 %v231, %v231
    %v856 = vmul.f32 %v232, %v232
    %v857 = vmul.f32 %v233, %v233
    %v858 = vmul.f32 %v234, %v234
    %v859 = vmul.f32 %v235, %v235
    %v860 = vmul.f32 %v236, %v236
    %v861 = vmul.f32 %v237, %v237
    %v862 = vmul.f32 %v238, %v238
    %v863 = vmul.f32 %v239, %v239
    %v864 = vmul.f32 %v240, %v240
    %v865 = vmul.f32 %v241, %v241
    %v866 = vmul.f32 %v242, %v242
    %v867 = vmul.f32 %v243, %v243
    %v868 = vmul.f32 %v244, %v244
    %v869 = vmul.f32 %v245, %v245
    %v870 = vmul.f32 %v246, %v246
    %v871 = vmul.f32 %v247, %v247
    %v872 = vmul.f32 %v248, %v248
    %v873 = vmul.f32 %v249, %v249
    %v874 = vmul.f32 %v250, %v250
    %v875 = vsel %vm194, %v843, 0.0
    %v876 = vsel %vm194, %v844, 0.0
    %v877 = vadd.f32 %v875, %v876
    %v878 = vsel %vm194, %v845, 0.0
    %v879 = vadd.f32 %v877, %v878
    %v880 = vsel %vm194, %v846, 0.0
    %v881 = vadd.f32 %v879, %v880
    %v882 = vsel %vm194, %v847, 0.0
    %v883 = vadd.f32 %v881, %v882
    %v884 = vsel %vm194, %v848, 0.0
    %v885 = vadd.f32 %v883, %v884
    %v886 = vsel %vm194, %v849, 0.0
    %v887 = vadd.f32 %v885, %v886
    %v888 = vsel %vm194, %v850, 0.0
    %v889 = vadd.f32 %v887, %v888
    %v890 = vsel %vm194, %v851, 0.0
    %v891 = vadd.f32 %v889, %v890
    %v892 = vsel %vm194, %v852, 0.0
    %v893 = vadd.f32 %v891, %v892
    %v894 = vsel %vm194, %v853, 0.0
    %v895 = vadd.f32 %v893, %v894
    %v896 = vsel %vm194, %v854, 0.0
    %v897 = vadd.f32 %v895, %v896
    %v898 = vsel %vm194, %v855, 0.0
    %v899 = vadd.f32 %v897, %v898
    %v900 = vsel %vm194, %v856, 0.0
    %v901 = vadd.f32 %v899, %v900
    %v902 = vsel %vm194, %v857, 0.0
    %v903 = vadd.f32 %v901, %v902
    %v904 = vsel %vm194, %v858, 0.0
    %v905 = vadd.f32 %v903, %v904
    %v906 = vsel %vm194, %v859, 0.0
    %v907 = vadd.f32 %v905, %v906
    %v908 = vsel %vm194, %v860, 0.0
    %v909 = vadd.f32 %v907, %v908
    %v910 = vsel %vm194, %v861, 0.0
    %v911 = vadd.f32 %v909, %v910
    %v912 = vsel %vm194, %v862, 0.0
    %v913 = vadd.f32 %v911, %v912
    %v914 = vsel %vm194, %v863, 0.0
    %v915 = vadd.f32 %v913, %v914
    %v916 = vsel %vm194, %v864, 0.0
    %v917 = vadd.f32 %v915, %v916
    %v918 = vsel %vm194, %v865, 0.0
    %v919 = vadd.f32 %v917, %v918
    %v920 = vsel %vm194, %v866, 0.0
    %v921 = vadd.f32 %v919, %v920
    %v922 = vsel %vm194, %v867, 0.0
    %v923 = vadd.f32 %v921, %v922
    %v924 = vsel %vm194, %v868, 0.0
    %v925 = vadd.f32 %v923, %v924
    %v926 = vsel %vm194, %v869, 0.0
    %v927 = vadd.f32 %v925, %v926
    %v928 = vsel %vm194, %v870, 0.0
    %v929 = vadd.f32 %v927, %v928
    %v930 = vsel %vm194, %v871, 0.0
    %v931 = vadd.f32 %v929, %v930
    %v932 = vsel %vm194, %v872, 0.0
    %v933 = vadd.f32 %v931, %v932
    %v934 = vsel %vm194, %v873, 0.0
    %v935 = vadd.f32 %v933, %v934
    %v936 = vsel %vm194, %v874, 0.0
    %v937 = vadd.f32 %v935, %v936
    %938 = vadd.xlane.f32.xlu0 %v937
    %v939 = vpop.xlane.xlu0 %938
    %v940 = vrot.slane %v939, 4
    %v941 = vadd.f32 %v939, %v940
    %v942 = vrot.slane %v941, 2
    %v943 = vadd.f32 %v941, %v942
    %v944 = vrot.slane %v943, 1
    %v945 = vadd.f32 %v943, %v944
    %s946 = vtos %v945
    %v947 = vmul.f32 %v539, %v539
    %v948 = vmul.f32 %v540, %v540
    %v949 = vmul.f32 %v541, %v541
    %v950 = vmul.f32 %v542, %v542
    %v951 = vmul.f32 %v543, %v543
    %v952 = vmul.f32 %v544, %v544
    %v953 = vmul.f32 %v545, %v545
    %v954 = vmul.f32 %v546, %v546
    %v955 = vmul.f32 %v547, %v547
    %v956 = vmul.f32 %v548, %v548
    %v957 = vmul.f32 %v549, %v549
    %v958 = vmul.f32 %v550, %v550
    %v959 = vmul.f32 %v551, %v551
    %v960 = vmul.f32 %v552, %v552
    %v961 = vmul.f32 %v553, %v553
    %v962 = vmul.f32 %v554, %v554
    %v963 = vmul.f32 %v555, %v555
    %v964 = vmul.f32 %v556, %v556
    %v965 = vmul.f32 %v557, %v557
    %v966 = vmul.f32 %v558, %v558
    %v967 = vmul.f32 %v559, %v559
    %v968 = vmul.f32 %v560, %v560
    %v969 = vmul.f32 %v561, %v561
    %v970 = vmul.f32 %v562, %v562
    %v971 = vmul.f32 %v563, %v563
    %v972 = vmul.f32 %v564, %v564
    %v973 = vmul.f32 %v565, %v565
    %v974 = vmul.f32 %v566, %v566
    %v975 = vmul.f32 %v567, %v567
    %v976 = vmul.f32 %v568, %v568
    %v977 = vmul.f32 %v569, %v569
    %v978 = vmul.f32 %v570, %v570
    %v979 = vsel %vm194, %v947, 0.0
    %v980 = vsel %vm194, %v948, 0.0
    %v981 = vadd.f32 %v979, %v980
    %v982 = vsel %vm194, %v949, 0.0
    %v983 = vadd.f32 %v981, %v982
    %v984 = vsel %vm194, %v950, 0.0
    %v985 = vadd.f32 %v983, %v984
    %v986 = vsel %vm194, %v951, 0.0
    %v987 = vadd.f32 %v985, %v986
    %v988 = vsel %vm194, %v952, 0.0
    %v989 = vadd.f32 %v987, %v988
    %v990 = vsel %vm194, %v953, 0.0
    %v991 = vadd.f32 %v989, %v990
    %v992 = vsel %vm194, %v954, 0.0
    %v993 = vadd.f32 %v991, %v992
    %v994 = vsel %vm194, %v955, 0.0
    %v995 = vadd.f32 %v993, %v994
    %v996 = vsel %vm194, %v956, 0.0
    %v997 = vadd.f32 %v995, %v996
    %v998 = vsel %vm194, %v957, 0.0
    %v999 = vadd.f32 %v997, %v998
    %v1000 = vsel %vm194, %v958, 0.0
    %v1001 = vadd.f32 %v999, %v1000
    %v1002 = vsel %vm194, %v959, 0.0
    %v1003 = vadd.f32 %v1001, %v1002
    %v1004 = vsel %vm194, %v960, 0.0
    %v1005 = vadd.f32 %v1003, %v1004
    %v1006 = vsel %vm194, %v961, 0.0
    %v1007 = vadd.f32 %v1005, %v1006
    %v1008 = vsel %vm194, %v962, 0.0
    %v1009 = vadd.f32 %v1007, %v1008
    %v1010 = vsel %vm194, %v963, 0.0
    %v1011 = vadd.f32 %v1009, %v1010
    %v1012 = vsel %vm194, %v964, 0.0
    %v1013 = vadd.f32 %v1011, %v1012
    %v1014 = vsel %vm194, %v965, 0.0
    %v1015 = vadd.f32 %v1013, %v1014
    %v1016 = vsel %vm194, %v966, 0.0
    %v1017 = vadd.f32 %v1015, %v1016
    %v1018 = vsel %vm194, %v967, 0.0
    %v1019 = vadd.f32 %v1017, %v1018
    %v1020 = vsel %vm194, %v968, 0.0
    %v1021 = vadd.f32 %v1019, %v1020
    %v1022 = vsel %vm194, %v969, 0.0
    %v1023 = vadd.f32 %v1021, %v1022
    %v1024 = vsel %vm194, %v970, 0.0
    %v1025 = vadd.f32 %v1023, %v1024
    %v1026 = vsel %vm194, %v971, 0.0
    %v1027 = vadd.f32 %v1025, %v1026
    %v1028 = vsel %vm194, %v972, 0.0
    %v1029 = vadd.f32 %v1027, %v1028
    %v1030 = vsel %vm194, %v973, 0.0
    %v1031 = vadd.f32 %v1029, %v1030
    %v1032 = vsel %vm194, %v974, 0.0
    %v1033 = vadd.f32 %v1031, %v1032
    %v1034 = vsel %vm194, %v975, 0.0
    %v1035 = vadd.f32 %v1033, %v1034
    %v1036 = vsel %vm194, %v976, 0.0
    %v1037 = vadd.f32 %v1035, %v1036
    %v1038 = vsel %vm194, %v977, 0.0
    %v1039 = vadd.f32 %v1037, %v1038
    %v1040 = vsel %vm194, %v978, 0.0
    %v1041 = vadd.f32 %v1039, %v1040
    %1042 = vadd.xlane.f32.xlu0 %v1041
    %v1043 = vpop.xlane.xlu0 %1042
    %v1044 = vrot.slane %v1043, 4
    %v1045 = vadd.f32 %v1043, %v1044
    %v1046 = vrot.slane %v1045, 2
    %v1047 = vadd.f32 %v1045, %v1046
    %v1048 = vrot.slane %v1047, 1
    %v1049 = vadd.f32 %v1047, %v1048
    %s1050 = vtos %v1049
    %v1051 = vmul.f32 %v811, %v811
    %v1052 = vmul.f32 %v812, %v812
    %v1053 = vmul.f32 %v813, %v813
    %v1054 = vmul.f32 %v814, %v814
    %v1055 = vmul.f32 %v815, %v815
    %v1056 = vmul.f32 %v816, %v816
    %v1057 = vmul.f32 %v817, %v817
    %v1058 = vmul.f32 %v818, %v818
    %v1059 = vmul.f32 %v819, %v819
    %v1060 = vmul.f32 %v820, %v820
    %v1061 = vmul.f32 %v821, %v821
    %v1062 = vmul.f32 %v822, %v822
    %v1063 = vmul.f32 %v823, %v823
    %v1064 = vmul.f32 %v824, %v824
    %v1065 = vmul.f32 %v825, %v825
    %v1066 = vmul.f32 %v826, %v826
    %v1067 = vmul.f32 %v827, %v827
    %v1068 = vmul.f32 %v828, %v828
    %v1069 = vmul.f32 %v829, %v829
    %v1070 = vmul.f32 %v830, %v830
    %v1071 = vmul.f32 %v831, %v831
    %v1072 = vmul.f32 %v832, %v832
    %v1073 = vmul.f32 %v833, %v833
    %v1074 = vmul.f32 %v834, %v834
    %v1075 = vmul.f32 %v835, %v835
    %v1076 = vmul.f32 %v836, %v836
    %v1077 = vmul.f32 %v837, %v837
    %v1078 = vmul.f32 %v838, %v838
    %v1079 = vmul.f32 %v839, %v839
    %v1080 = vmul.f32 %v840, %v840
    %v1081 = vmul.f32 %v841, %v841
    %v1082 = vmul.f32 %v842, %v842
    %v1083 = vsel %vm60, %v1051, 0.0
    %v1084 = vsel %vm60, %v1052, 0.0
    %v1085 = vadd.f32 %v1083, %v1084
    %v1086 = vsel %vm60, %v1053, 0.0
    %v1087 = vadd.f32 %v1085, %v1086
    %v1088 = vsel %vm60, %v1054, 0.0
    %v1089 = vadd.f32 %v1087, %v1088
    %v1090 = vsel %vm60, %v1055, 0.0
    %v1091 = vadd.f32 %v1089, %v1090
    %v1092 = vsel %vm60, %v1056, 0.0
    %v1093 = vadd.f32 %v1091, %v1092
    %v1094 = vsel %vm60, %v1057, 0.0
    %v1095 = vadd.f32 %v1093, %v1094
    %v1096 = vsel %vm60, %v1058, 0.0
    %v1097 = vadd.f32 %v1095, %v1096
    %v1098 = vsel %vm60, %v1059, 0.0
    %v1099 = vadd.f32 %v1097, %v1098
    %v1100 = vsel %vm60, %v1060, 0.0
    %v1101 = vadd.f32 %v1099, %v1100
    %v1102 = vsel %vm60, %v1061, 0.0
    %v1103 = vadd.f32 %v1101, %v1102
    %v1104 = vsel %vm60, %v1062, 0.0
    %v1105 = vadd.f32 %v1103, %v1104
    %v1106 = vsel %vm60, %v1063, 0.0
    %v1107 = vadd.f32 %v1105, %v1106
    %v1108 = vsel %vm60, %v1064, 0.0
    %v1109 = vadd.f32 %v1107, %v1108
    %v1110 = vsel %vm60, %v1065, 0.0
    %v1111 = vadd.f32 %v1109, %v1110
    %v1112 = vsel %vm60, %v1066, 0.0
    %v1113 = vadd.f32 %v1111, %v1112
    %v1114 = vsel %vm60, %v1067, 0.0
    %v1115 = vadd.f32 %v1113, %v1114
    %v1116 = vsel %vm60, %v1068, 0.0
    %v1117 = vadd.f32 %v1115, %v1116
    %v1118 = vsel %vm60, %v1069, 0.0
    %v1119 = vadd.f32 %v1117, %v1118
    %v1120 = vsel %vm60, %v1070, 0.0
    %v1121 = vadd.f32 %v1119, %v1120
    %v1122 = vsel %vm60, %v1071, 0.0
    %v1123 = vadd.f32 %v1121, %v1122
    %v1124 = vsel %vm60, %v1072, 0.0
    %v1125 = vadd.f32 %v1123, %v1124
    %v1126 = vsel %vm60, %v1073, 0.0
    %v1127 = vadd.f32 %v1125, %v1126
    %v1128 = vsel %vm60, %v1074, 0.0
    %v1129 = vadd.f32 %v1127, %v1128
    %v1130 = vsel %vm60, %v1075, 0.0
    %v1131 = vadd.f32 %v1129, %v1130
    %v1132 = vsel %vm60, %v1076, 0.0
    %v1133 = vadd.f32 %v1131, %v1132
    %v1134 = vsel %vm60, %v1077, 0.0
    %v1135 = vadd.f32 %v1133, %v1134
    %v1136 = vsel %vm60, %v1078, 0.0
    %v1137 = vadd.f32 %v1135, %v1136
    %v1138 = vsel %vm60, %v1079, 0.0
    %v1139 = vadd.f32 %v1137, %v1138
    %v1140 = vsel %vm60, %v1080, 0.0
    %v1141 = vadd.f32 %v1139, %v1140
    %v1142 = vsel %vm60, %v1081, 0.0
    %v1143 = vadd.f32 %v1141, %v1142
    %v1144 = vsel %vm60, %v1082, 0.0
    %v1145 = vadd.f32 %v1143, %v1144
    %1146 = vadd.xlane.f32.xlu0 %v1145
    %v1147 = vpop.xlane.xlu0 %1146
    %v1148 = vrot.slane %v1147, 4
    %v1149 = vadd.f32 %v1147, %v1148
    %v1150 = vrot.slane %v1149, 2
    %v1151 = vadd.f32 %v1149, %v1150
    %v1152 = vrot.slane %v1151, 1
    %v1153 = vadd.f32 %v1151, %v1152
    %s1154 = vtos %v1153
    %s1155 = sadd.f32 %s1050, %s1154
    %s1156 = ssub.f32 %s1155, %s946
    %v1157 = vrcp.pop 256.0
    %s1158 = vtos %v1157
    %s1159 = smul.f32 %s1156, %s1158
    %v1160 = vrcp.pop 64.0
    %s1161 = vtos %v1160
    %s1162 = smul.f32 %s218, %s1161
    %s1163 = ssub.f32 %s1159, %s1162
    %s1164 = sadd.f32 %s1163, 58.812065
    %s1165 = smul.f32 %s1164, 0.5
    %s1166 = scalar_lea.smem [#allocation2], 0
    %1167 = sst [smem:[%s1166]] %s1165
    // Predicated region
    $region26: #{elbo_loss.1} parent=1 // pred_check
      _
    $region27: #{elbo_loss.1} parent=1 // pred_check_branch
      %1169 = sbr.rel (0) target = $region29
    $region28: #{elbo_loss.1} parent=1 // pred_region
      %s1171 = ssub.s32 16, 16
      %1172 = vsyncadd [#allocation3], %s1171
      %1175 = dma.smem_to_hbm [#allocation2], 16, %s6, [#allocation3]
    $region29: #{elbo_loss.1} parent=1 // pred_fallthru
      _
    // Predicated region
    $region30: #{elbo_loss.1} parent=1 // pred_check
      _
    $region31: #{elbo_loss.1} parent=1 // pred_check_branch
      %1177 = sbr.rel (0) target = $region33
    $region32: #{elbo_loss.1} parent=1 // pred_region
      %1178 = dma.done [#allocation3], 16
    $region33: #{elbo_loss.1} parent=1 // pred_fallthru
      _
    %1179 = sfence
    %1180 = vsyncpa [#allocation3], 1

</llo_original>
